<compile_context>
chip_gen: v7x
topology: tpu7x:2x2x1
jax: 0.10.0
libtpu: 0.0.40
codegen_flags: <defaults>
</compile_context>

<pallas_src>
import functools

import jax
import jax.numpy as jnp
from jax.experimental import pallas as pl
from jax.experimental.pallas import tpu as pltpu

LANES = 128

# ~4 MiB per input block: amortises the ~0.35 us/step overhead on all
# generations while double-buffering comfortably under the scoped-VMEM limit
# requested below (32 MiB <= physical VMEM on v5e/v6e/v7x).
REDUCE_BLOCK_BYTES = 4 * 1024 * 1024
NONE_BLOCK_BYTES = 4 * 1024 * 1024
VMEM_LIMIT_BYTES = 32 * 1024 * 1024


def _device_kind() -> str:
    try:
        return jax.devices()[0].device_kind.lower()
    except Exception:  # pragma: no cover - defensive
        return ""


def _pick_acc_rows(tile_rows: int) -> int:
    """Widest accumulator height that divides the tile (prefers 128 rows =
    16 independent vreg chains); odd/small tiles accumulate at full height."""
    for cand in (128, 64, 32, 16, 8):
        if tile_rows % cand == 0:
            return cand
    return tile_rows


# ----------------------------------------------------------------------------
# Reduction kernel (mode == 'mean' or 'sum').
# grid = (num_partials [parallel], tiles_per_partial [arbitrary])
# The output block itself is the resident accumulator (P3 pattern).
# ----------------------------------------------------------------------------
def _barrier_reduce_kernel(x_ref, o_ref, *, thresh, barrier, compute_dtype,
                           acc_rows, tile_rows, n_tiles, tiles_per_partial,
                           tail_rows, has_dummy):
    p = pl.program_id(0)
    j = pl.program_id(1)
    i_global = p * tiles_per_partial + j

    @pl.when(j == 0)
    def _init():
        o_ref[...] = jnp.zeros_like(o_ref)

    def _fold(loss_f32):
        # Fold a (tile_rows, LANES) f32 tile into the (acc_rows, LANES)
        # resident output block.  acc_rows == 128 for large tiles, giving 16
        # independent accumulation chains; the tiny partial block is reduced
        # outside the kernel.
        if loss_f32.shape[0] == acc_rows:
            o_ref[...] += loss_f32
        else:
            o_ref[...] += loss_f32.reshape(-1, acc_rows, LANES).sum(axis=0)

    def _accumulate():
        x = x_ref[...]
        if x.dtype != compute_dtype:
            x = x.astype(compute_dtype)
        # Python-float constants stay weak-typed -> math runs in compute_dtype
        # (bf16 on v6e/v7x for bf16 inputs, f32 otherwise); accumulate in f32.
        loss = (-jnp.log(jnp.maximum(x, thresh) - barrier)).astype(jnp.float32)
        if tail_rows == tile_rows:
            # Statically known: every tile is fully valid -> no mask anywhere.
            _fold(loss)
        else:
            # Row-ragged final tile: only it pays for the iota mask.
            @pl.when(i_global == n_tiles - 1)
            def _edge():
                row = jax.lax.broadcasted_iota(jnp.int32, loss.shape, 0)
                _fold(jnp.where(row < tail_rows, loss, 0.0))

            @pl.when(i_global != n_tiles - 1)
            def _interior():
                _fold(loss)

    if has_dummy:
        # Tiles past the end (from rounding n_tiles up to the partial split on
        # v7x) are skipped; their clamped DMA re-reads the last real block.
        pl.when(i_global < n_tiles)(_accumulate)
    else:
        _accumulate()


# ----------------------------------------------------------------------------
# Elementwise kernel (mode == 'none').
# ----------------------------------------------------------------------------
def _barrier_elementwise_kernel(x_ref, o_ref, *, thresh, barrier, compute_dtype):
    x = x_ref[...]
    if x.dtype != compute_dtype:
        x = x.astype(compute_dtype)
    loss = -jnp.log(jnp.maximum(x, thresh) - barrier)
    o_ref[...] = loss.astype(o_ref.dtype)


# ----------------------------------------------------------------------------
# Wrapper ("the module")
# ----------------------------------------------------------------------------
class Barrier:
    # TODO(synk): float64 (listed by the PyTorch module) is dropped: TPUs have
    # no f64 and its barrier (~2.2e-308) underflows f32 kernel math.
    SUPPORTED = (jnp.float32, jnp.float16, jnp.bfloat16)

    def __init__(self, safety_factor: float, barrier_epsilon: float,
                 mode: str = 'mean'):
        self.safety_factor = float(safety_factor)
        self.barrier_epsilon = float(barrier_epsilon)
        self.mode = mode
        self.barriers = {jnp.dtype(t): float(jnp.finfo(t).tiny) * self.safety_factor
                         for t in self.SUPPORTED}
        kind = _device_kind()
        self._is_v7 = "v7" in kind                       # 2 TensorCores / chip
        self._bf16_math = ("v6" in kind) or ("v7" in kind)  # native bf16 EUP

    def _compute_dtype(self, dtype):
        # bf16-native max/sub/log on v6e/v7x keeps the single EUP slot off the
        # critical path for bf16 inputs (accumulation stays f32); f32 math on
        # v5e (no bf16 VPU/EUP) and for f16 (would drop mantissa bits).
        if dtype == jnp.dtype(jnp.bfloat16) and self._bf16_math:
            return jnp.bfloat16
        return jnp.float32

    # ---------------- reduce (mean / sum) ----------------
    def _reduce(self, x, dtype, barrier, thresh, compute_dtype):
        n = int(x.size)
        itemsize = dtype.itemsize
        x_flat = x.reshape(-1)                    # free reshape (contiguous)

        n_main = (n // LANES) * LANES
        rem = n - n_main

        # Lane-ragged remainder (<128 elements) folded in plain JAX so the
        # kernel never needs a lane mask and the whole array is never padded.
        tail_sum = None
        if rem:
            tail = x_flat[n_main:].astype(jnp.float32)
            tail_sum = jnp.sum(-jnp.log(jnp.maximum(tail, thresh) - barrier),
                               dtype=jnp.float32)

        if n_main == 0:
            total = tail_sum if tail_sum is not None else jnp.float32(0.0)
        else:
            if rem:
                # TODO(synk): this prefix slice is one extra HBM pass for
                # lane-ragged n; a fully zero-copy path would need a (1, n)
                # lane-major slab layout.
                x_main = x_flat[:n_main]
            else:
                x_main = x_flat
            rows = n_main // LANES
            x2d = x_main.reshape(rows, LANES)

            max_rows = max(REDUCE_BLOCK_BYTES // (LANES * itemsize), 8)
            if rows <= max_rows:
                tile_rows, n_tiles = rows, 1
            else:
                tile_rows, n_tiles = int(max_rows), int(pl.cdiv(rows, max_rows))
            tail_rows = rows - (n_tiles - 1) * tile_rows
            acc_rows = _pick_acc_rows(tile_rows)

            # One partial per TensorCore: 2 only on v7x, 1 on v5e/v6e (avoids
            # the dummy-tile DMA re-read and extra init/finalize on 1-TC chips).
            num_partials = 2 if (self._is_v7 and n_tiles >= 2) else 1
            tpp = int(pl.cdiv(n_tiles, num_partials))
            has_dummy = (num_partials * tpp != n_tiles)

            kernel = functools.partial(
                _barrier_reduce_kernel,
                thresh=thresh, barrier=barrier, compute_dtype=compute_dtype,
                acc_rows=acc_rows, tile_rows=tile_rows, n_tiles=n_tiles,
                tiles_per_partial=tpp, tail_rows=tail_rows, has_dummy=has_dummy)

            def in_map(p, j):
                # Clamp so dummy tiles (past the end) never index OOB blocks.
                return (jnp.minimum(p * tpp + j, n_tiles - 1), 0)

            in_spec = pl.BlockSpec((tile_rows, LANES), in_map)
            if self._is_v7 and hasattr(pl, "Buffered"):
                try:
                    # 3-deep input pipeline hides DMA-issue latency at v7x BW.
                    in_spec = pl.BlockSpec((tile_rows, LANES), in_map,
                                           pipeline_mode=pl.Buffered(3))
                except TypeError:
                    in_spec = pl.BlockSpec((tile_rows, LANES), in_map)

            partials = pl.pallas_call(
                kernel,
                out_shape=jax.ShapeDtypeStruct(
                    (num_partials * acc_rows, LANES), jnp.float32),
                grid_spec=pltpu.PrefetchScalarGridSpec(
                    num_scalar_prefetch=0,
                    grid=(num_partials, tpp),
                    in_specs=[in_spec],
                    out_specs=pl.BlockSpec((acc_rows, LANES),
                                           lambda p, j: (p, 0))),
                compiler_params=pltpu.CompilerParams(
                    dimension_semantics=("parallel", "arbitrary"),
                    vmem_limit_bytes=VMEM_LIMIT_BYTES),
                cost_estimate=pl.CostEstimate(
                    flops=3 * n_main, transcendentals=n_main,
                    bytes_accessed=n_main * itemsize
                    + num_partials * acc_rows * LANES * 4),
            )(x2d)

            total = jnp.sum(partials, dtype=jnp.float32)
            if tail_sum is not None:
                total = total + tail_sum

        if self.mode == 'mean':
            total = total / jnp.float32(n)
        # Match PyTorch: the reduced loss carries the input dtype.
        # TODO(synk): f16 'sum' can overflow 65504 after this cast (PyTorch in
        # fp16 would also overflow, via its own accumulation path).
        return total.astype(dtype)

    # ---------------- elementwise (none) ----------------
    def _elementwise(self, x, dtype, barrier, thresh, compute_dtype):
        orig_shape = x.shape
        n = int(x.size)
        itemsize = dtype.itemsize
        x_flat = x.reshape(-1)
        pad = (-n) % LANES
        if pad:
            # TODO(synk): lane-ragged 'none' mode pays one pad copy; kept
            # simple since the elementwise output must be reassembled anyway.
            x_flat = jnp.pad(x_flat, (0, pad))
        rows = (n + pad) // LANES
        x2d = x_flat.reshape(rows, LANES)

        max_rows = max(NONE_BLOCK_BYTES // (LANES * itemsize), 8)
        if rows <= max_rows:
            tile_rows, n_tiles = rows, 1
        else:
            tile_rows, n_tiles = int(max_rows), int(pl.cdiv(rows, max_rows))

        kernel = functools.partial(_barrier_elementwise_kernel,
                                   thresh=thresh, barrier=barrier,
                                   compute_dtype=compute_dtype)
        out2d = pl.pallas_call(
            kernel,
            out_shape=jax.ShapeDtypeStruct((rows, LANES), dtype),
            grid_spec=pltpu.PrefetchScalarGridSpec(
                num_scalar_prefetch=0,
                grid=(n_tiles,),
                in_specs=[pl.BlockSpec((tile_rows, LANES), lambda i: (i, 0))],
                out_specs=pl.BlockSpec((tile_rows, LANES), lambda i: (i, 0))),
            compiler_params=pltpu.CompilerParams(
                dimension_semantics=("parallel",),
                vmem_limit_bytes=VMEM_LIMIT_BYTES),
            cost_estimate=pl.CostEstimate(
                flops=3 * n, transcendentals=n,
                bytes_accessed=2 * n * itemsize),
        )(x2d)
        out = out2d.reshape(-1)
        if pad:
            out = out[:n]
        return out.reshape(orig_shape)

    def __call__(self, x: jax.Array) -> jax.Array:
        dtype = jnp.dtype(x.dtype)
        if dtype not in self.barriers:
            raise RuntimeError(f'Dtype {dtype} is not a supported barrier tensor.')
        barrier = self.barriers[dtype]
        thresh = barrier + self.barrier_epsilon
        compute_dtype = self._compute_dtype(dtype)

        if self.mode in ('mean', 'sum'):
            return self._reduce(x, dtype, barrier, thresh, compute_dtype)
        if self.mode == 'none':
            return self._elementwise(x, dtype, barrier, thresh, compute_dtype)
        raise ValueError(
            f"Unknown mode {self.mode}, not among 'mean', 'sum', 'none'")


# Pure-JAX reference for correctness checking.
def _reference(x, safety_factor, eps, mode):
    barrier = float(jnp.finfo(x.dtype).tiny) * safety_factor
    xf = x.astype(jnp.float32)
    thresh = barrier + eps
    clamped = jnp.where(xf < thresh, thresh, xf)
    loss = -jnp.log(clamped - barrier)
    if mode == 'mean':
        return loss.mean()
    if mode == 'sum':
        return loss.sum()
    return loss


if __name__ == "__main__":
    key = jax.random.PRNGKey(0)
    safety_factor = 2.0
    barrier_epsilon = 1e-6

    # Small NCHW-like tensor of "things to be careful with".
    x = jax.random.normal(key, (2, 4, 16, 16), dtype=jnp.float32)

    # mean mode (default)
    out_mean = jax.block_until_ready(Barrier(safety_factor, barrier_epsilon, 'mean')(x))
    ref_mean = _reference(x, safety_factor, barrier_epsilon, 'mean')
    assert jnp.allclose(out_mean, ref_mean, rtol=1e-5, atol=1e-4), (out_mean, ref_mean)

    # sum mode
    out_sum = jax.block_until_ready(Barrier(safety_factor, barrier_epsilon, 'sum')(x))
    ref_sum = _reference(x, safety_factor, barrier_epsilon, 'sum')
    assert jnp.allclose(out_sum, ref_sum, rtol=1e-4, atol=1e-2), (out_sum, ref_sum)

    # none mode (elementwise)
    out_none = jax.block_until_ready(Barrier(safety_factor, barrier_epsilon, 'none')(x))
    ref_none = _reference(x, safety_factor, barrier_epsilon, 'none')
    assert out_none.shape == x.shape
    assert jnp.allclose(out_none, ref_none, rtol=1e-5, atol=1e-5)

    # lane-ragged and smaller than one lane row (pure plain-JAX tail path)
    x_rag = jax.random.normal(jax.random.PRNGKey(1), (3, 5, 7), dtype=jnp.float32)
    out_rag = jax.block_until_ready(Barrier(safety_factor, barrier_epsilon, 'mean')(x_rag))
    ref_rag = _reference(x_rag, safety_factor, barrier_epsilon, 'mean')
    assert jnp.allclose(out_rag, ref_rag, rtol=1e-5, atol=1e-4), (out_rag, ref_rag)

    # lane-ragged with a kernel main part + plain-JAX remainder
    x_rag2 = jax.random.normal(jax.random.PRNGKey(3), (17, 129), dtype=jnp.float32)
    out_rag2 = jax.block_until_ready(Barrier(safety_factor, barrier_epsilon, 'sum')(x_rag2))
    ref_rag2 = _reference(x_rag2, safety_factor, barrier_epsilon, 'sum')
    assert jnp.allclose(out_rag2, ref_rag2, rtol=1e-4, atol=1e-2), (out_rag2, ref_rag2)
    out_rag2n = jax.block_until_ready(Barrier(safety_factor, barrier_epsilon, 'none')(x_rag2))
    ref_rag2n = _reference(x_rag2, safety_factor, barrier_epsilon, 'none')
    assert jnp.allclose(out_rag2n, ref_rag2n, rtol=1e-5, atol=1e-5)

    # bf16 (exercises sub-32-bit layout / optional bf16 math path)
    x_bf = jax.random.normal(jax.random.PRNGKey(2), (2, 4, 16, 16), dtype=jnp.bfloat16)
    out_bf = jax.block_until_ready(Barrier(safety_factor, barrier_epsilon, 'sum')(x_bf))
    ref_bf = _reference(x_bf, safety_factor, barrier_epsilon, 'sum')
    assert jnp.allclose(out_bf.astype(jnp.float32), ref_bf, rtol=3e-2, atol=2.0), (out_bf, ref_bf)

    # multi-tile path with a row-ragged last tile (~4 MiB of data)
    x_big = jax.random.normal(jax.random.PRNGKey(4), (2100, 512), dtype=jnp.float32)
    out_big = jax.block_until_ready(Barrier(safety_factor, barrier_epsilon, 'mean')(x_big))
    ref_big = _reference(x_big, safety_factor, barrier_epsilon, 'mean')
    assert jnp.allclose(out_big, ref_big, rtol=1e-4, atol=1e-3), (out_big, ref_big)

    print("KERNEL_OK")
</pallas_src>

<mosaic_0001>
module attributes {stable_mosaic.version = 11 : i64} {
  func.func @_barrier_reduce_kernel(%arg0: i32, %arg1: i32, %arg2: memref<16x128xf32, #tpu.memory_space<vmem>>, %arg3: memref<16x128xf32, #tpu.memory_space<vmem>>) attributes {dimension_semantics = [#tpu.dimension_semantics<parallel>, #tpu.dimension_semantics<arbitrary>], iteration_bounds = array<i64: 1, 1>, scalar_prefetch = 0 : i64, scratch_operands = 0 : i64, tpu.core_type = #tpu.core_type<tc>, window_params = [{transform_indices = @transform_0, window_bounds = array<i64: 16, 128>}, {transform_indices = @transform_1, window_bounds = array<i64: 16, 128>}]} {
    %c0_i32 = arith.constant 0 : i32
    %0 = arith.cmpi eq, %arg1, %c0_i32 : i32
    %1 = arith.extui %0 : i1 to i32
    %c0_i32_0 = arith.constant 0 : i32
    %2 = arith.cmpi ne, %1, %c0_i32_0 : i32
    scf.if %2 {
      %cst_8 = arith.constant 0.000000e+00 : f32
      %14 = vector.broadcast %cst_8 : f32 to vector<16x128xf32>
      %c0_9 = arith.constant 0 : index
      %c0_10 = arith.constant 0 : index
      %15 = vector.load %arg3[%c0_9, %c0_10] : memref<16x128xf32, #tpu.memory_space<vmem>>, vector<16x128xf32>
      tpu.vector_store %arg3[%c0_9, %c0_10], %14 {strides = array<i32>} : memref<16x128xf32, #tpu.memory_space<vmem>>, vector<16x128xf32>,
    } else {
    }
    %c0 = arith.constant 0 : index
    %c0_1 = arith.constant 0 : index
    %3 = vector.load %arg2[%c0, %c0_1] : memref<16x128xf32, #tpu.memory_space<vmem>>, vector<16x128xf32>
    %cst = arith.constant 9.99999997E-7 : f32
    %4 = vector.broadcast %cst : f32 to vector<16x128xf32>
    %5 = arith.maximumf %3, %4 : vector<16x128xf32>
    %cst_2 = arith.constant 2.3509887E-38 : f32
    %6 = vector.broadcast %cst_2 : f32 to vector<16x128xf32>
    %7 = arith.subf %5, %6 : vector<16x128xf32>
    %8 = math.log %7 : vector<16x128xf32>
    %cst_3 = arith.constant 0.000000e+00 : f32
    %9 = vector.broadcast %cst_3 : f32 to vector<16x128xf32>
    %10 = arith.subf %9, %8 : vector<16x128xf32>
    %c0_4 = arith.constant 0 : index
    %c0_5 = arith.constant 0 : index
    %11 = vector.load %arg3[%c0_4, %c0_5] : memref<16x128xf32, #tpu.memory_space<vmem>>, vector<16x128xf32>
    %12 = arith.addf %11, %10 : vector<16x128xf32>
    %c0_6 = arith.constant 0 : index
    %c0_7 = arith.constant 0 : index
    %13 = vector.load %arg3[%c0_6, %c0_7] : memref<16x128xf32, #tpu.memory_space<vmem>>, vector<16x128xf32>
    tpu.vector_store %arg3[%c0_6, %c0_7], %12 {strides = array<i32>} : memref<16x128xf32, #tpu.memory_space<vmem>>, vector<16x128xf32>,
    return
  }
  func.func @transform_0(%arg0: i32, %arg1: i32) -> (i32, i32) {
    %c1_i32 = arith.constant 1 : i32
    %0 = arith.muli %arg0, %c1_i32 : i32
    %1 = arith.addi %0, %arg1 : i32
    %c0_i32 = arith.constant 0 : i32
    %2 = arith.minsi %1, %c0_i32 : i32
    %c0_i32_0 = arith.constant 0 : i32
    %c0_i32_1 = arith.constant 0 : i32
    return %2, %c0_i32_0 : i32, i32
  }
  func.func @transform_1(%arg0: i32, %arg1: i32) -> (i32, i32) {
    %c0_i32 = arith.constant 0 : i32
    %c0_i32_0 = arith.constant 0 : i32
    return %arg0, %c0_i32 : i32, i32
  }
}

</mosaic_0001>

<llo_original>
// kernel: tpu_custom_call.1
$region0: #{tpu_custom_call.1}
  #allocation0 [shape = 'u32[]', space=smem, size = 0x4, offset = 0x4, fixed_abs, tag = 'smem constant byte address 0x4 - core index']
  #allocation1 [shape = 'u32[144,128]{1,0:T(1,128)}', space=vmem, size = 0x12000, scoped, tag = 'internal scratch']
  %s0 = inlined_call_operand.hbm [shape: f32[16,128], index: 0, kind: input, shape index: {}]
  %s1 = inlined_call_operand.hbm [shape: f32[16,128], index: 1, kind: output, shape index: {}]
  %s2 = sld [smem:[#allocation0]]
  $region22: #{tpu_custom_call.1} parent=0
    _
  %s4 = ssub.s32 1, %s2
  %s5 = scalar_select 0, %s4, %s2
  $region1: #{tpu_custom_call.1} parent=0
    #allocation2 [shape = 'u8[8192]{0}', space=vmem, size = 0x2000, scoped, tag = 'input window, operand 0, single buffered']
    #allocation3 [shape = 's32[1]{0}', space=sflag, size = 0x4, scoped, tag = 'scoped memory for tpu_custom_call.1']
    #allocation4 [shape = 's32[1]{0}', space=sflag, size = 0x4, scoped, tag = 'scoped memory for tpu_custom_call.1']
    #allocation5 [shape = 'u8[8192]{0}', space=vmem, size = 0x2000, scoped, tag = 'output window, operand 0, single buffered']
    %6 = vsyncpa [#allocation3], 0
    %7 = vsyncpa [#allocation4], 0
    // Predicated region
    $region2: #{tpu_custom_call.1} parent=1 // pred_check
      _
    $region3: #{tpu_custom_call.1} parent=1 // pred_check_branch
      %9 = sbr.rel (0) target = $region5
    $region4: #{tpu_custom_call.1} parent=1 // pred_region
      %s10 = sadd.s32 0, 0
      %p11 = scmp.lt.s32.totalorder %s10, 0
      %s12 = scalar_select %p11, %s10, 0
      %s13 = smul.u32 2, %s12
      %s15 = ssub.s32 256, 256
      %16 = vsyncadd [#allocation3], %s15
      %s17 = smul.addr %s13, 128
      %s18 = scalar_lea.hbm %s0, %s17
      %s19 = sshll.u32 [#allocation2], 4
      %s20 = int_to_ptr.vmem [resolvable:$true] %s19
      %25 = dma.hbm_to_vmem [thread:$0]  %s18, 256, %s20, [#allocation3], 128, 128, 8
    $region5: #{tpu_custom_call.1} parent=1 // pred_fallthru
      _
    // Predicated region
    $region6: #{tpu_custom_call.1} parent=1 // pred_check
      _
    $region7: #{tpu_custom_call.1} parent=1 // pred_check_branch
      %27 = sbr.rel (0) target = $region9
    $region8: #{tpu_custom_call.1} parent=1 // pred_region
      %28 = dma.done [#allocation3], 256
    $region9: #{tpu_custom_call.1} parent=1 // pred_fallthru
      _
    %s29 = sadd.s32 0, 0
    %p30 = scmp.lt.s32.totalorder %s29, 0
    %s31 = scalar_select %p30, %s29, 0
    %s32 = smul.u32 2, %s31
    %p33 = scmp.eq.s32.totalorder 0, 0
    // Predicated region
    $region10: #{tpu_custom_call.1} parent=1 // pred_check
      %p34 = pneg %p33
    $region11: #{tpu_custom_call.1} parent=1 // pred_check_branch
      %36 = sbr.rel (%p34) target = $region13
    $region12: #{tpu_custom_call.1} parent=1 // pred_region
      %37 = vst [vmem:[#allocation5] sm:$0xff] 0.0
      %38 = vst [vmem:[#allocation5 + $0x8] sm:$0xff] 0.0
    $region13: #{tpu_custom_call.1} parent=1 // pred_fallthru
      _
    %v39 = vld [vmem:[#allocation2] sm:$0xff]
    %v40 = vld [vmem:[#allocation2 + $0x8] sm:$0xff]
    %v41 = vmax.f32 %v39, 1e-06
    %v42 = vmax.f32 %v40, 1e-06
    %v43 = vsub.f32 %v41, 2.3509887e-38
    %v44 = vsub.f32 %v42, 2.3509887e-38
    %v45 = vlog2.pop %v43
    %v46 = vmul.f32 %v45, 0.6931472
    %v47 = vlog2.pop %v44
    %v48 = vmul.f32 %v47, 0.6931472
    %v49 = vsub.f32 0.0, %v46
    %v50 = vsub.f32 0.0, %v48
    %v51 = vld [vmem:[#allocation5] sm:$0xff]
    %v52 = vld [vmem:[#allocation5 + $0x8] sm:$0xff]
    %v53 = vadd.f32 %v51, %v49
    %v54 = vadd.f32 %v52, %v50
    %55 = vst [vmem:[#allocation5] sm:$0xff] %v53
    %56 = vst [vmem:[#allocation5 + $0x8] sm:$0xff] %v54
    // Predicated region
    $region14: #{tpu_custom_call.1} parent=1 // pred_check
      _
    $region15: #{tpu_custom_call.1} parent=1 // pred_check_branch
      %58 = sbr.rel (0) target = $region17
    $region16: #{tpu_custom_call.1} parent=1 // pred_region
      %s60 = ssub.s32 256, 256
      %61 = vsyncadd [#allocation4], %s60
      %s62 = sshll.u32 [#allocation5], 4
      %s63 = int_to_ptr.vmem [resolvable:$true] %s62
      %68 = dma.vmem_to_hbm [thread:$0]  %s63, 256, %s1, [#allocation4], 128, 128, 8
    $region17: #{tpu_custom_call.1} parent=1 // pred_fallthru
      _
    // Predicated region
    $region18: #{tpu_custom_call.1} parent=1 // pred_check
      _
    $region19: #{tpu_custom_call.1} parent=1 // pred_check_branch
      %70 = sbr.rel (0) target = $region21
    $region20: #{tpu_custom_call.1} parent=1 // pred_region
      %71 = dma.done [#allocation4], 256
    $region21: #{tpu_custom_call.1} parent=1 // pred_fallthru
      _
    %72 = vsyncpa [#allocation3], 1
    %73 = vsyncpa [#allocation4], 1

</llo_original>
